<compile_context>
chip_gen: v5e
topology: v5e:2x2
jax: 0.10.0
libtpu: 0.0.40
codegen_flags: <defaults>
</compile_context>

<pallas_src>
import jax
import jax.numpy as jnp
from jax.experimental import pallas as pl
from jax.experimental.pallas import tpu as pltpu


HALO = 8  # halo block height (sublane granule); supports kernel heights kh <= 9


def _round_up(x, m):
    return (x + m - 1) // m * m


def _conv2d_kernel(k_ref, b_ref, xa_ref, xb_ref, o_ref):
    # k_ref : (kh, kw)        f32 SMEM  (scalar tap weights)
    # b_ref : (1,)            f32 SMEM
    # xa_ref: (TILE_H, W_pad) f32 VMEM  (body rows of this output tile)
    # xb_ref: (HALO,  W_pad)  f32 VMEM  (next HALO rows: the kh-1 row halo)
    # o_ref : (TILE_H, W_pad) f32 VMEM  (lane-dense, full padded width)
    kh, kw = k_ref.shape
    tile_h, w_pad = o_ref.shape

    # Rows [0, tile_h + HALO) of the padded input, starting at this tile's row.
    x = jnp.concatenate([xa_ref[...], xb_ref[...]], axis=0)

    acc = jnp.zeros((tile_h, w_pad), dtype=jnp.float32)
    # Static (unrolled) tap loops: sublane-offset slice for the row offset di,
    # XLU lane rotation for the column offset dj, VPU mul/add accumulate.
    for di in range(kh):
        x_di = x[di:di + tile_h, :]
        for dj in range(kw):
            if dj == 0:
                shifted = x_di
            else:
                # shifted[:, c] == x_di[:, c + dj]  (wrap lands in trimmed cols)
                shifted = pltpu.roll(x_di, shift=w_pad - dj, axis=1)
            acc = acc + shifted * k_ref[di, dj]

    o_ref[...] = acc + b_ref[0]


def conv2d_pallas(x, weight, bias, *, tile_h=None,
                  vmem_budget_bytes=8 * 1024 * 1024):
    """Pallas equivalent of Conv2D.forward: corr2d(x, weight) + bias."""
    H, W = x.shape
    kh, kw = weight.shape
    assert kh <= H and kw <= W, "kernel must fit inside the input"
    assert kh - 1 <= HALO, "row halo supports kernel heights up to 9"
    # TODO(synk): kh > 9 would need a taller halo block (or multiple halo blocks).

    Ho, Wo = H - kh + 1, W - kw + 1

    # Lane-dense padded width (multiple of 128) -> unmasked full-width stores.
    W_pad = max(128, _round_up(W, 128))

    # Output-row tile height: multiple of 8 sublanes, sized so the
    # double-buffered input + output blocks stay well under the scoped VMEM
    # limit on every generation (v5e 16 MiB default, v7x 64 MiB physical).
    if tile_h is None:
        per_row_bytes = W_pad * 4 * 4        # (in + out) blocks x 2 buffers
        tile_h = max(8, (vmem_budget_bytes // per_row_bytes))
    tile_h = int(min(tile_h, _round_up(Ho, 8), 512))
    tile_h = max(8, (tile_h // 8) * 8)

    nt = pl.cdiv(Ho, tile_h)                 # number of output row tiles
    H_pad = nt * tile_h + HALO               # body rows + halo rows available

    x_pad = jnp.zeros((H_pad, W_pad), dtype=jnp.float32)
    x_pad = x_pad.at[:H, :W].set(x.astype(jnp.float32))

    halo_blk = tile_h // HALO                # halo block index stride (int)

    out_padded = pl.pallas_call(
        _conv2d_kernel,
        out_shape=jax.ShapeDtypeStruct((nt * tile_h, W_pad), jnp.float32),
        grid=(nt,),
        in_specs=[
            pl.BlockSpec(memory_space=pltpu.MemorySpace.SMEM),   # weight
            pl.BlockSpec(memory_space=pltpu.MemorySpace.SMEM),   # bias
            # body rows of tile i: [i*tile_h, (i+1)*tile_h)
            pl.BlockSpec((tile_h, W_pad), lambda i: (i, 0)),
            # halo rows of tile i: [(i+1)*tile_h, (i+1)*tile_h + HALO)
            pl.BlockSpec((HALO, W_pad), lambda i: ((i + 1) * halo_blk, 0)),
        ],
        out_specs=pl.BlockSpec((tile_h, W_pad), lambda i: (i, 0)),
        compiler_params=pltpu.CompilerParams(
            dimension_semantics=("parallel",),
            vmem_limit_bytes=32 * 1024 * 1024,
        ),
    )(weight.astype(jnp.float32), bias.astype(jnp.float32), x_pad, x_pad)

    # Trim the padded rows / the last kw-1 (and padded) columns in the wrapper.
    return out_padded[:Ho, :Wo]


def conv2d_ref(x, weight, bias):
    """Pure-JAX reference (same semantics as torch corr2d + bias)."""
    H, W = x.shape
    kh, kw = weight.shape
    Ho, Wo = H - kh + 1, W - kw + 1
    acc = jnp.zeros((Ho, Wo), dtype=jnp.float32)
    for di in range(kh):
        for dj in range(kw):
            acc = acc + x[di:di + Ho, dj:dj + Wo] * weight[di, dj]
    return acc + bias[0]


if __name__ == "__main__":
    key = jax.random.PRNGKey(0)
    kx, kw_, kb, kx2 = jax.random.split(key, 4)

    # Demo shape matching the module's 2-D (H, W) input. NOTE: at 16x16 the
    # kernel is pure launch/DMA overhead; the tiling only matters at real sizes.
    H, W = 16, 16
    kernel_size = (3, 3)

    x = jax.random.normal(kx, (H, W), dtype=jnp.float32)
    weight = jax.random.normal(kw_, kernel_size, dtype=jnp.float32)  # torch.randn stand-in
    bias = jax.random.normal(kb, (1,), dtype=jnp.float32)

    out = jax.block_until_ready(conv2d_pallas(x, weight, bias))
    ref = conv2d_ref(x, weight, bias)
    assert out.shape == (H - kernel_size[0] + 1, W - kernel_size[1] + 1)
    assert jnp.allclose(out, ref, atol=1e-5, rtol=1e-5)

    # Small multi-tile sanity check (forces nt > 1 through the grid/halo path).
    H2, W2 = 40, 20
    x2 = jax.random.normal(kx2, (H2, W2), dtype=jnp.float32)
    out2 = jax.block_until_ready(conv2d_pallas(x2, weight, bias, tile_h=16))
    ref2 = conv2d_ref(x2, weight, bias)
    assert out2.shape == (H2 - 2, W2 - 2)
    assert jnp.allclose(out2, ref2, atol=1e-5, rtol=1e-5)

    print("KERNEL_OK")
</pallas_src>

<mosaic_0001>
module attributes {stable_mosaic.version = 11 : i64} {
  func.func @_conv2d_kernel(%arg0: i32, %arg1: memref<3x3xf32, #tpu.memory_space<smem>>, %arg2: memref<1xf32, #tpu.memory_space<smem>>, %arg3: memref<16x128xf32, #tpu.memory_space<vmem>>, %arg4: memref<8x128xf32, #tpu.memory_space<vmem>>, %arg5: memref<16x128xf32, #tpu.memory_space<vmem>>) attributes {dimension_semantics = [#tpu.dimension_semantics<parallel>], iteration_bounds = array<i64: 1>, scalar_prefetch = 0 : i64, scratch_operands = 0 : i64, tpu.core_type = #tpu.core_type<tc>, window_params = [{transform_indices = @transform_0, window_bounds = array<i64: 3, 3>}, {transform_indices = @transform_1, window_bounds = array<i64: 1>}, {transform_indices = @transform_2, window_bounds = array<i64: 16, 128>}, {transform_indices = @transform_3, window_bounds = array<i64: 8, 128>}, {transform_indices = @transform_4, window_bounds = array<i64: 16, 128>}]} {
    %c0 = arith.constant 0 : index
    %c0_0 = arith.constant 0 : index
    %0 = vector.load %arg3[%c0, %c0_0] : memref<16x128xf32, #tpu.memory_space<vmem>>, vector<16x128xf32>
    %c0_1 = arith.constant 0 : index
    %c0_2 = arith.constant 0 : index
    %1 = vector.load %arg4[%c0_1, %c0_2] : memref<8x128xf32, #tpu.memory_space<vmem>>, vector<8x128xf32>
    %2 = tpu.concatenate %0, %1 in 0 : vector<16x128xf32>, vector<8x128xf32> -> vector<24x128xf32>
    %cst = arith.constant 0.000000e+00 : f32
    %3 = vector.broadcast %cst : f32 to vector<16x128xf32>
    %4 = vector.extract_strided_slice %2 {offsets = [0, 0], sizes = [16, 128], strides = [1, 1]} : vector<24x128xf32> to vector<16x128xf32>
    %c0_3 = arith.constant 0 : index
    %c0_4 = arith.constant 0 : index
    %5 = memref.load %arg1[%c0_3, %c0_4] : memref<3x3xf32, #tpu.memory_space<smem>>
    %6 = vector.broadcast %5 : f32 to vector<16x128xf32>
    %7 = arith.mulf %4, %6 : vector<16x128xf32>
    %8 = arith.addf %3, %7 : vector<16x128xf32>
    %c127_i32 = arith.constant 127 : i32
    %9 = tpu.dynamic_rotate %4 by %c127_i32 dim 1 : vector<16x128xf32>, i32 -> vector<16x128xf32>
    %c0_5 = arith.constant 0 : index
    %c1 = arith.constant 1 : index
    %10 = memref.load %arg1[%c0_5, %c1] : memref<3x3xf32, #tpu.memory_space<smem>>
    %11 = vector.broadcast %10 : f32 to vector<16x128xf32>
    %12 = arith.mulf %9, %11 : vector<16x128xf32>
    %13 = arith.addf %8, %12 : vector<16x128xf32>
    %c126_i32 = arith.constant 126 : i32
    %14 = tpu.dynamic_rotate %4 by %c126_i32 dim 1 : vector<16x128xf32>, i32 -> vector<16x128xf32>
    %c0_6 = arith.constant 0 : index
    %c2 = arith.constant 2 : index
    %15 = memref.load %arg1[%c0_6, %c2] : memref<3x3xf32, #tpu.memory_space<smem>>
    %16 = vector.broadcast %15 : f32 to vector<16x128xf32>
    %17 = arith.mulf %14, %16 : vector<16x128xf32>
    %18 = arith.addf %13, %17 : vector<16x128xf32>
    %19 = vector.extract_strided_slice %2 {offsets = [1, 0], sizes = [16, 128], strides = [1, 1]} : vector<24x128xf32> to vector<16x128xf32>
    %c1_7 = arith.constant 1 : index
    %c0_8 = arith.constant 0 : index
    %20 = memref.load %arg1[%c1_7, %c0_8] : memref<3x3xf32, #tpu.memory_space<smem>>
    %21 = vector.broadcast %20 : f32 to vector<16x128xf32>
    %22 = arith.mulf %19, %21 : vector<16x128xf32>
    %23 = arith.addf %18, %22 : vector<16x128xf32>
    %c127_i32_9 = arith.constant 127 : i32
    %24 = tpu.dynamic_rotate %19 by %c127_i32_9 dim 1 : vector<16x128xf32>, i32 -> vector<16x128xf32>
    %c1_10 = arith.constant 1 : index
    %c1_11 = arith.constant 1 : index
    %25 = memref.load %arg1[%c1_10, %c1_11] : memref<3x3xf32, #tpu.memory_space<smem>>
    %26 = vector.broadcast %25 : f32 to vector<16x128xf32>
    %27 = arith.mulf %24, %26 : vector<16x128xf32>
    %28 = arith.addf %23, %27 : vector<16x128xf32>
    %c126_i32_12 = arith.constant 126 : i32
    %29 = tpu.dynamic_rotate %19 by %c126_i32_12 dim 1 : vector<16x128xf32>, i32 -> vector<16x128xf32>
    %c1_13 = arith.constant 1 : index
    %c2_14 = arith.constant 2 : index
    %30 = memref.load %arg1[%c1_13, %c2_14] : memref<3x3xf32, #tpu.memory_space<smem>>
    %31 = vector.broadcast %30 : f32 to vector<16x128xf32>
    %32 = arith.mulf %29, %31 : vector<16x128xf32>
    %33 = arith.addf %28, %32 : vector<16x128xf32>
    %34 = vector.extract_strided_slice %2 {offsets = [2, 0], sizes = [16, 128], strides = [1, 1]} : vector<24x128xf32> to vector<16x128xf32>
    %c2_15 = arith.constant 2 : index
    %c0_16 = arith.constant 0 : index
    %35 = memref.load %arg1[%c2_15, %c0_16] : memref<3x3xf32, #tpu.memory_space<smem>>
    %36 = vector.broadcast %35 : f32 to vector<16x128xf32>
    %37 = arith.mulf %34, %36 : vector<16x128xf32>
    %38 = arith.addf %33, %37 : vector<16x128xf32>
    %c127_i32_17 = arith.constant 127 : i32
    %39 = tpu.dynamic_rotate %34 by %c127_i32_17 dim 1 : vector<16x128xf32>, i32 -> vector<16x128xf32>
    %c2_18 = arith.constant 2 : index
    %c1_19 = arith.constant 1 : index
    %40 = memref.load %arg1[%c2_18, %c1_19] : memref<3x3xf32, #tpu.memory_space<smem>>
    %41 = vector.broadcast %40 : f32 to vector<16x128xf32>
    %42 = arith.mulf %39, %41 : vector<16x128xf32>
    %43 = arith.addf %38, %42 : vector<16x128xf32>
    %c126_i32_20 = arith.constant 126 : i32
    %44 = tpu.dynamic_rotate %34 by %c126_i32_20 dim 1 : vector<16x128xf32>, i32 -> vector<16x128xf32>
    %c2_21 = arith.constant 2 : index
    %c2_22 = arith.constant 2 : index
    %45 = memref.load %arg1[%c2_21, %c2_22] : memref<3x3xf32, #tpu.memory_space<smem>>
    %46 = vector.broadcast %45 : f32 to vector<16x128xf32>
    %47 = arith.mulf %44, %46 : vector<16x128xf32>
    %48 = arith.addf %43, %47 : vector<16x128xf32>
    %c0_23 = arith.constant 0 : index
    %49 = memref.load %arg2[%c0_23] : memref<1xf32, #tpu.memory_space<smem>>
    %50 = vector.broadcast %49 : f32 to vector<16x128xf32>
    %51 = arith.addf %48, %50 : vector<16x128xf32>
    %c0_24 = arith.constant 0 : index
    %c0_25 = arith.constant 0 : index
    %52 = vector.load %arg5[%c0_24, %c0_25] : memref<16x128xf32, #tpu.memory_space<vmem>>, vector<16x128xf32>
    tpu.vector_store %arg5[%c0_24, %c0_25], %51 {strides = array<i32>} : memref<16x128xf32, #tpu.memory_space<vmem>>, vector<16x128xf32>,
    return
  }
  func.func @transform_0(%arg0: i32) -> (i32, i32) {
    %c0_i32 = arith.constant 0 : i32
    %c0_i32_0 = arith.constant 0 : i32
    %c0_i32_1 = arith.constant 0 : i32
    return %c0_i32, %c0_i32_0 : i32, i32
  }
  func.func @transform_1(%arg0: i32) -> i32 {
    %c0_i32 = arith.constant 0 : i32
    %c0_i32_0 = arith.constant 0 : i32
    return %c0_i32 : i32
  }
  func.func @transform_2(%arg0: i32) -> (i32, i32) {
    %c0_i32 = arith.constant 0 : i32
    %c0_i32_0 = arith.constant 0 : i32
    return %arg0, %c0_i32 : i32, i32
  }
  func.func @transform_3(%arg0: i32) -> (i32, i32) {
    %c1_i32 = arith.constant 1 : i32
    %0 = arith.addi %arg0, %c1_i32 : i32
    %c2_i32 = arith.constant 2 : i32
    %1 = arith.muli %0, %c2_i32 : i32
    %c0_i32 = arith.constant 0 : i32
    %c0_i32_0 = arith.constant 0 : i32
    return %1, %c0_i32 : i32, i32
  }
  func.func @transform_4(%arg0: i32) -> (i32, i32) {
    %c0_i32 = arith.constant 0 : i32
    %c0_i32_0 = arith.constant 0 : i32
    return %arg0, %c0_i32 : i32, i32
  }
}

</mosaic_0001>

<llo_original>
// kernel: tpu_custom_call.1
$region0: #{tpu_custom_call.1}
  #allocation0 [shape = 'u32[]', space=smem, size = 0x4, offset = 0x4, fixed_abs, tag = 'smem constant byte address 0x4 - core index']
  #allocation1 [shape = 'u32[72,128]{1,0:T(1,128)}', space=vmem, size = 0x9000, scoped, tag = 'internal scratch']
  #allocation2 [shape = 'f32[1]{0:T(128)S(6)}', space=smem, size = 0x200, scoped, tag = 'scoped memory for tpu_custom_call.1']
  %s0 = inlined_call_operand.hbm [shape: f32[3,3], index: 0, kind: input, shape index: {}]
  %s1 = inlined_call_operand.<no memory space> [shape: f32[1], index: 1, kind: input, shape index: {}]
  %s2 = inlined_call_operand.hbm [shape: f32[24,128], index: 2, kind: input, shape index: {}]
  %s3 = inlined_call_operand.hbm [shape: f32[24,128], index: 3, kind: input, shape index: {}]
  %s4 = inlined_call_operand.hbm [shape: f32[16,128], index: 4, kind: output, shape index: {}]
  %s5 = sld [smem:[#allocation0]]
  $region38: #{tpu_custom_call.1} parent=0
    _
  %s7 = ssub.s32 1, %s5
  %s8 = scalar_select 0, %s7, %s5
  %9 = sst [smem:[#allocation2]] %s1
  $region1: #{tpu_custom_call.1} parent=0
    #allocation3 [shape = 'u8[2048]{0}', space=smem, size = 0x800, scoped, tag = 'input window, operand 0, single buffered']
    #allocation4 [shape = 's32[1]{0}', space=sflag, size = 0x4, scoped, tag = 'scoped memory for tpu_custom_call.1']
    #allocation5 [shape = 's32[1]{0}', space=sflag, size = 0x4, scoped, tag = 'scoped memory for tpu_custom_call.1']
    #allocation6 [shape = 's32[1]{0}', space=sflag, size = 0x4, scoped, tag = 'scoped memory for tpu_custom_call.1']
    #allocation7 [shape = 'u8[8192]{0}', space=vmem, size = 0x2000, scoped, tag = 'input window, operand 2, single buffered']
    #allocation8 [shape = 'u8[4096]{0}', space=vmem, size = 0x1000, scoped, tag = 'input window, operand 3, single buffered']
    #allocation9 [shape = 's32[1]{0}', space=sflag, size = 0x4, scoped, tag = 'scoped memory for tpu_custom_call.1']
    #allocation10 [shape = 'u8[8192]{0}', space=vmem, size = 0x2000, scoped, tag = 'output window, operand 0, single buffered']
    %10 = vsyncpa [#allocation6], 0
    %11 = vsyncpa [#allocation4], 0
    %12 = vsyncpa [#allocation9], 0
    %13 = vsyncpa [#allocation5], 0
    // Predicated region
    $region2: #{tpu_custom_call.1} parent=1 // pred_check
      _
    $region3: #{tpu_custom_call.1} parent=1 // pred_check_branch
      %15 = sbr.rel (0) target = $region5
    $region4: #{tpu_custom_call.1} parent=1 // pred_region
      %17 = vsyncadd [#allocation6], 0
      %s19 = sshll.u32 %s0, 4
      %s20 = int_to_ptr.hbm [resolvable:$true] %s19
      %22 = dma.hbm_to_smem %s20, 64, [#allocation3], [#allocation6]
    $region5: #{tpu_custom_call.1} parent=1 // pred_fallthru
      _
    // Predicated region
    $region6: #{tpu_custom_call.1} parent=1 // pred_check
      _
    $region7: #{tpu_custom_call.1} parent=1 // pred_check_branch
      %24 = sbr.rel (0) target = $region9
    $region8: #{tpu_custom_call.1} parent=1 // pred_region
      _
    $region9: #{tpu_custom_call.1} parent=1 // pred_fallthru
      _
    // Predicated region
    $region10: #{tpu_custom_call.1} parent=1 // pred_check
      _
    $region11: #{tpu_custom_call.1} parent=1 // pred_check_branch
      %26 = sbr.rel (0) target = $region13
    $region12: #{tpu_custom_call.1} parent=1 // pred_region
      %28 = vsyncadd [#allocation4], 0
      %s29 = sshll.u32 %s2, 4
      %s30 = int_to_ptr.hbm [resolvable:$true] %s29
      %s31 = sshll.u32 [#allocation7], 4
      %s32 = int_to_ptr.vmem [resolvable:$true] %s31
      %37 = dma.hbm_to_vmem [thread:$0]  %s30, 256, %s32, [#allocation4], 128, 128, 8
    $region13: #{tpu_custom_call.1} parent=1 // pred_fallthru
      _
    // Predicated region
    $region14: #{tpu_custom_call.1} parent=1 // pred_check
      _
    $region15: #{tpu_custom_call.1} parent=1 // pred_check_branch
      %39 = sbr.rel (0) target = $region17
    $region16: #{tpu_custom_call.1} parent=1 // pred_region
      %s40 = sadd.s32 0, 1
      %s41 = smul.u32 %s40, 2
      %43 = vsyncadd [#allocation9], 0
      %s44 = smul.addr %s41, 8
      %s45 = scalar_lea.hbm %s3, %s44
      %s47 = sshll.u32 %s45, 4
      %s48 = int_to_ptr.hbm [resolvable:$true] %s47
      %s49 = sshll.u32 [#allocation8], 4
      %s50 = int_to_ptr.vmem [resolvable:$true] %s49
      %52 = dma.hbm_to_vmem [thread:$0]  %s48, 128, %s50, [#allocation9]
    $region17: #{tpu_custom_call.1} parent=1 // pred_fallthru
      _
    // Predicated region
    $region18: #{tpu_custom_call.1} parent=1 // pred_check
      _
    $region19: #{tpu_custom_call.1} parent=1 // pred_check_branch
      %54 = sbr.rel (0) target = $region21
    $region20: #{tpu_custom_call.1} parent=1 // pred_region
      %56 = dma.done [#allocation6], 64
    $region21: #{tpu_custom_call.1} parent=1 // pred_fallthru
      _
    // Predicated region
    $region22: #{tpu_custom_call.1} parent=1 // pred_check
      _
    $region23: #{tpu_custom_call.1} parent=1 // pred_check_branch
      %58 = sbr.rel (0) target = $region25
    $region24: #{tpu_custom_call.1} parent=1 // pred_region
      %60 = dma.done [#allocation4], 256
    $region25: #{tpu_custom_call.1} parent=1 // pred_fallthru
      _
    // Predicated region
    $region26: #{tpu_custom_call.1} parent=1 // pred_check
      _
    $region27: #{tpu_custom_call.1} parent=1 // pred_check_branch
      %62 = sbr.rel (0) target = $region29
    $region28: #{tpu_custom_call.1} parent=1 // pred_region
      %64 = dma.done [#allocation9], 128
    $region29: #{tpu_custom_call.1} parent=1 // pred_fallthru
      _
    %65 = sfence
    %s66 = sadd.s32 0, 1
    %s67 = smul.u32 %s66, 2
    %v68 = vld [vmem:[#allocation7] sm:$0xff]
    %v69 = vld [vmem:[#allocation7 + $0x8] sm:$0xff]
    %v70 = vld [vmem:[#allocation8] sm:$0xff]
    %s71 = sld [smem:[#allocation3]]
    %v72 = vstv %s71
    %v73 = vmul.f32 %v68, %v72
    %v74 = vmul.f32 %v69, %v72
    %v75 = vadd.f32 %v73, 0.0
    %v76 = vadd.f32 %v74, 0.0
    %77 = vrot.lane.b32.xlu0 %v68, 127
    %v78 = vpop.permute.xlu0 %77
    %79 = vrot.lane.b32.xlu0 %v69, 127
    %v80 = vpop.permute.xlu0 %79
    %s81 = sld [smem:[#allocation3 + $0x1]]
    %v82 = vstv %s81
    %v83 = vmul.f32 %v78, %v82
    %v84 = vmul.f32 %v80, %v82
    %v85 = vadd.f32 %v75, %v83
    %v86 = vadd.f32 %v76, %v84
    %87 = vrot.lane.b32.xlu0 %v68, 126
    %v88 = vpop.permute.xlu0 %87
    %89 = vrot.lane.b32.xlu0 %v69, 126
    %v90 = vpop.permute.xlu0 %89
    %s91 = sld [smem:[#allocation3 + $0x2]]
    %v92 = vstv %s91
    %v93 = vmul.f32 %v88, %v92
    %v94 = vmul.f32 %v90, %v92
    %v95 = vadd.f32 %v85, %v93
    %v96 = vadd.f32 %v86, %v94
    %s97 = sld [smem:[#allocation3 + $0x80]]
    %v98 = vstv %s97
    %v99 = vmul.f32 %v68, %v98
    %v100 = vmul.f32 %v69, %v98
    %v101 = vmul.f32 %v70, %v98
    %vm105 = vcmask 1046528
    %v106 = vrot.slane %v99, 1
    %v107 = vrot.slane %v100, 1
    %v108 = vsel %vm105, %v106, %v107
    %v109 = vrot.slane %v101, 1
    %v110 = vsel %vm105, %v107, %v109
    %v113 = vadd.f32 %v95, %v108
    %v114 = vadd.f32 %v96, %v110
    %v118 = vrot.slane %v68, 1
    %v119 = vrot.slane %v69, 1
    %v120 = vsel %vm105, %v118, %v119
    %v121 = vrot.slane %v70, 1
    %v122 = vsel %vm105, %v119, %v121
    %125 = vrot.lane.b32.xlu0 %v120, 127
    %v126 = vpop.permute.xlu0 %125
    %127 = vrot.lane.b32.xlu0 %v122, 127
    %v128 = vpop.permute.xlu0 %127
    %s129 = sld [smem:[#allocation3 + $0x81]]
    %v130 = vstv %s129
    %v131 = vmul.f32 %v126, %v130
    %v132 = vmul.f32 %v128, %v130
    %v133 = vadd.f32 %v113, %v131
    %v134 = vadd.f32 %v114, %v132
    %135 = vrot.lane.b32.xlu0 %v120, 126
    %v136 = vpop.permute.xlu0 %135
    %137 = vrot.lane.b32.xlu0 %v122, 126
    %v138 = vpop.permute.xlu0 %137
    %s139 = sld [smem:[#allocation3 + $0x82]]
    %v140 = vstv %s139
    %v141 = vmul.f32 %v136, %v140
    %v142 = vmul.f32 %v138, %v140
    %v143 = vadd.f32 %v133, %v141
    %v144 = vadd.f32 %v134, %v142
    %s145 = sld [smem:[#allocation3 + $0x100]]
    %v146 = vstv %s145
    %v147 = vmul.f32 %v68, %v146
    %v148 = vmul.f32 %v69, %v146
    %v149 = vmul.f32 %v70, %v146
    %vm153 = vcmask 1045504
    %v154 = vrot.slane %v147, 2
    %v155 = vrot.slane %v148, 2
    %v156 = vsel %vm153, %v154, %v155
    %v157 = vrot.slane %v149, 2
    %v158 = vsel %vm153, %v155, %v157
    %v161 = vadd.f32 %v143, %v156
    %v162 = vadd.f32 %v144, %v158
    %v163 = vrot.slane %v68, 2
    %v164 = vrot.slane %v69, 2
    %v165 = vsel %vm153, %v163, %v164
    %v166 = vrot.slane %v70, 2
    %v167 = vsel %vm153, %v164, %v166
    %170 = vrot.lane.b32.xlu0 %v165, 127
    %v171 = vpop.permute.xlu0 %170
    %172 = vrot.lane.b32.xlu0 %v167, 127
    %v173 = vpop.permute.xlu0 %172
    %s174 = sld [smem:[#allocation3 + $0x101]]
    %v175 = vstv %s174
    %v176 = vmul.f32 %v171, %v175
    %v177 = vmul.f32 %v173, %v175
    %v178 = vadd.f32 %v161, %v176
    %v179 = vadd.f32 %v162, %v177
    %180 = vrot.lane.b32.xlu0 %v165, 126
    %v181 = vpop.permute.xlu0 %180
    %182 = vrot.lane.b32.xlu0 %v167, 126
    %v183 = vpop.permute.xlu0 %182
    %s184 = sld [smem:[#allocation3 + $0x102]]
    %v185 = vstv %s184
    %v186 = vmul.f32 %v181, %v185
    %v187 = vmul.f32 %v183, %v185
    %v188 = vadd.f32 %v178, %v186
    %v189 = vadd.f32 %v179, %v187
    %s190 = sld [smem:[#allocation2]]
    %v191 = vstv %s190
    %v192 = vadd.f32 %v188, %v191
    %v193 = vadd.f32 %v189, %v191
    %194 = vst [vmem:[#allocation10] sm:$0xff] %v192
    %195 = vst [vmem:[#allocation10 + $0x8] sm:$0xff] %v193
    // Predicated region
    $region30: #{tpu_custom_call.1} parent=1 // pred_check
      _
    $region31: #{tpu_custom_call.1} parent=1 // pred_check_branch
      %197 = sbr.rel (0) target = $region33
    $region32: #{tpu_custom_call.1} parent=1 // pred_region
      %199 = vsyncadd [#allocation5], 0
      %s200 = sshll.u32 [#allocation10], 4
      %s201 = int_to_ptr.vmem [resolvable:$true] %s200
      %s202 = sshll.u32 %s4, 4
      %s203 = int_to_ptr.hbm [resolvable:$true] %s202
      %208 = dma.vmem_to_hbm [thread:$0]  %s201, 256, %s203, [#allocation5], 128, 128, 8
    $region33: #{tpu_custom_call.1} parent=1 // pred_fallthru
      _
    // Predicated region
    $region34: #{tpu_custom_call.1} parent=1 // pred_check
      _
    $region35: #{tpu_custom_call.1} parent=1 // pred_check_branch
      %210 = sbr.rel (0) target = $region37
    $region36: #{tpu_custom_call.1} parent=1 // pred_region
      %212 = dma.done [#allocation5], 256
    $region37: #{tpu_custom_call.1} parent=1 // pred_fallthru
      _
    %213 = vsyncpa [#allocation4], 1
    %214 = vsyncpa [#allocation9], 1
    %215 = vsyncpa [#allocation5], 1
    %216 = vsyncpa [#allocation6], 1

</llo_original>
